<compile_context>
chip_gen: v7x
topology: tpu7x:2x2x1
jax: 0.10.0
libtpu: 0.0.40
codegen_flags: <defaults>
</compile_context>

<pallas_src>
import functools

import jax
import jax.numpy as jnp
import numpy as np
from jax.experimental import pallas as pl
from jax.experimental.pallas import tpu as pltpu


INPUT_SIZE = 784
HIDDEN_SIZE = 64
H2 = 32
NUM_CLASSES = 10

H_PAD = 128   # hidden dim padded to one full lane width
N_PAD = 128   # output dim padded to one full lane width (sliced to 10 outside)


# ----------------------------------------------------------------------------
# Pallas kernel: fused (fc1 + ReLU) then folded (fc2·fc3) on one row-tile
# ----------------------------------------------------------------------------
def _mlp2_kernel(x_ref, w1_ref, b1_ref, w23_ref, b23_ref, o_ref):
    # fc1 + bias + ReLU (lane-dense: hidden padded to 128; padded lanes stay 0)
    h = jnp.dot(x_ref[...], w1_ref[...], preferred_element_type=jnp.float32)
    h = jnp.maximum(h + b1_ref[...], 0.0)
    # folded fc2·fc3 + bias (padded output lanes are exactly 0)
    o = jnp.dot(h, w23_ref[...], preferred_element_type=jnp.float32)
    o_ref[...] = (o + b23_ref[...]).astype(o_ref.dtype)


# ----------------------------------------------------------------------------
# Helpers
# ----------------------------------------------------------------------------
def _round_up(x, m):
    return (x + m - 1) // m * m


def _choose_row_tile(m0, desired_tm):
    """Row tile: multiple of 8; == padded batch for small batches; for large
    batches use desired_tm but keep >= 2 grid steps (v7x megacore split)."""
    m_min = _round_up(max(m0, 1), 8)
    if m_min <= desired_tm:
        return m_min
    half = _round_up(pl.cdiv(m_min, 2), 8)
    return max(8, min(desired_tm, half))


def _vmem_limit_bytes(tm, x_itemsize):
    need = (
        2 * tm * INPUT_SIZE * x_itemsize              # x tile, double-buffered
        + 2 * tm * N_PAD * 4                          # out tile, double-buffered
        + 2 * (INPUT_SIZE * H_PAD * x_itemsize        # w1
               + H_PAD * N_PAD * 4 + H_PAD * 4 + N_PAD * 4)
    )
    # 2x headroom; floor at 32 MiB (v5e scoped default is only 16 MiB),
    # cap at 48 MiB so we never over-allocate v7x's 64 MiB VMEM.
    return int(min(max(2 * need, 32 * 1024 * 1024), 48 * 1024 * 1024))


# ----------------------------------------------------------------------------
# Wrapper
# ----------------------------------------------------------------------------
def mlp2_forward(x, prepared_params, *, tm=512):
    """x: any shape whose trailing dims flatten to 784 (torch x.view(-1, 784))."""
    w1p, b1p, w23p, b23p = prepared_params
    K = INPUT_SIZE

    x2 = x.reshape(-1, K).astype(w1p.dtype)
    m0 = x2.shape[0]

    tm_eff = _choose_row_tile(m0, tm)
    m_pad = _round_up(m0, tm_eff)
    if m_pad != m0:
        x2 = jnp.pad(x2, ((0, m_pad - m0), (0, 0)))

    grid = (m_pad // tm_eff,)
    x_item = jnp.dtype(w1p.dtype).itemsize

    cost = pl.CostEstimate(
        flops=2 * m_pad * (K * HIDDEN_SIZE + HIDDEN_SIZE * NUM_CLASSES),
        transcendentals=0,
        bytes_accessed=(m_pad * K * x_item
                        + K * H_PAD * x_item + H_PAD * N_PAD * 4
                        + H_PAD * 4 + N_PAD * 4
                        + m_pad * N_PAD * 4),
    )

    out = pl.pallas_call(
        _mlp2_kernel,
        out_shape=jax.ShapeDtypeStruct((m_pad, N_PAD), jnp.float32),
        grid=grid,
        in_specs=[
            pl.BlockSpec((tm_eff, K), lambda i: (i, 0)),      # x row-tile
            pl.BlockSpec((K, H_PAD), lambda i: (0, 0)),       # w1 (whole, padded)
            pl.BlockSpec((1, H_PAD), lambda i: (0, 0)),       # b1
            pl.BlockSpec((H_PAD, N_PAD), lambda i: (0, 0)),   # folded W23
            pl.BlockSpec((1, N_PAD), lambda i: (0, 0)),       # folded b23
        ],
        out_specs=pl.BlockSpec((tm_eff, N_PAD), lambda i: (i, 0)),
        compiler_params=pltpu.CompilerParams(
            dimension_semantics=("parallel",),                # megacore on v7x
            vmem_limit_bytes=_vmem_limit_bytes(tm_eff, x_item),
        ),
        cost_estimate=cost,
    )(x2, w1p, b1p, w23p, b23p)

    return out[:m0, :NUM_CLASSES]


# ----------------------------------------------------------------------------
# Parameters (torch nn.Linear layout + default init), prepared once
# ----------------------------------------------------------------------------
def init_params(seed=0):
    """Torch-layout params: weight (out, in), bias (out,), U(+/- 1/sqrt(fan_in))."""
    key = jax.random.PRNGKey(seed)

    def linear_init(k, out_f, in_f):
        bound = 1.0 / np.sqrt(in_f)
        kw, kb = jax.random.split(k)
        w = jax.random.uniform(kw, (out_f, in_f), jnp.float32, -bound, bound)
        b = jax.random.uniform(kb, (out_f,), jnp.float32, -bound, bound)
        return w, b

    k1, k2, k3 = jax.random.split(key, 3)
    return {
        "fc1": linear_init(k1, HIDDEN_SIZE, INPUT_SIZE),
        "fc2": linear_init(k2, H2, HIDDEN_SIZE),
        "fc3": linear_init(k3, NUM_CLASSES, H2),
    }


def prepare_params(params, input_dtype=jnp.float32):
    """One-time prep (hoisted out of the forward):
       - transpose torch (out,in) -> (in,out)
       - fold fc2·fc3: W23 = w2ᵀ @ w3ᵀ, b23 = b2 @ w3ᵀ + b3 (exact, no ReLU between)
       - zero-pad hidden 64->128 lanes and output 10->128 lanes
       - optionally cast x-path weights (w1) to bf16 to halve HBM traffic."""
    w1, b1 = params["fc1"]
    w2, b2 = params["fc2"]
    w3, b3 = params["fc3"]

    w1t = jnp.asarray(w1, jnp.float32).T                         # (784, 64)
    w2t = jnp.asarray(w2, jnp.float32).T                         # (64, 32)
    w3t = jnp.asarray(w3, jnp.float32).T                         # (32, 10)

    w23 = w2t @ w3t                                              # (64, 10)
    b23 = jnp.asarray(b2, jnp.float32) @ w3t + jnp.asarray(b3, jnp.float32)

    w1p = jnp.zeros((INPUT_SIZE, H_PAD), jnp.float32).at[:, :HIDDEN_SIZE].set(w1t)
    b1p = jnp.zeros((1, H_PAD), jnp.float32).at[0, :HIDDEN_SIZE].set(
        jnp.asarray(b1, jnp.float32))
    w23p = jnp.zeros((H_PAD, N_PAD), jnp.float32).at[:HIDDEN_SIZE, :NUM_CLASSES].set(w23)
    b23p = jnp.zeros((1, N_PAD), jnp.float32).at[0, :NUM_CLASSES].set(b23)

    return (w1p.astype(input_dtype), b1p, w23p, b23p)


@functools.partial(jax.jit, static_argnames=("tm",))
def mlp2_jit(x, prepared_params, tm=512):
    return mlp2_forward(x, prepared_params, tm=tm)


def mlp2_reference(x, params):
    """Pure-jnp reference matching the torch forward (unfused, torch layout)."""
    w1, b1 = params["fc1"]
    w2, b2 = params["fc2"]
    w3, b3 = params["fc3"]
    h = jnp.maximum(x.reshape(-1, INPUT_SIZE) @ w1.T + b1, 0.0)
    h = h @ w2.T + b2
    return h @ w3.T + b3


if __name__ == "__main__":
    params = init_params(seed=0)
    prepared_f32 = prepare_params(params)                        # default f32 path

    # MNIST-style input; torch forward does x.view(-1, 784).
    x = jax.random.normal(jax.random.PRNGKey(0), (2, 1, 28, 28), dtype=jnp.float32)

    out = jax.block_until_ready(mlp2_jit(x, prepared_f32))
    assert out.shape == (2, NUM_CLASSES), out.shape
    assert out.dtype == jnp.float32
    ref = mlp2_reference(x, params)
    np.testing.assert_allclose(np.asarray(out), np.asarray(ref), rtol=1e-4, atol=1e-5)

    # Larger batch: exercises multi-step grid, row padding and the tile clamp.
    xb = jax.random.normal(jax.random.PRNGKey(1), (300, INPUT_SIZE), dtype=jnp.float32)
    outb = jax.block_until_ready(mlp2_jit(xb, prepared_f32, tm=128))
    refb = mlp2_reference(xb, params)
    np.testing.assert_allclose(np.asarray(outb), np.asarray(refb), rtol=1e-4, atol=1e-5)

    # Optional bf16-input path (halves the dominant HBM read); looser tolerance.
    prepared_bf16 = prepare_params(params, input_dtype=jnp.bfloat16)
    outc = jax.block_until_ready(mlp2_jit(xb, prepared_bf16, tm=128))
    np.testing.assert_allclose(np.asarray(outc), np.asarray(refb), rtol=5e-2, atol=5e-2)

    print("KERNEL_OK")
</pallas_src>

<mosaic_0001>
module attributes {stable_mosaic.version = 11 : i64} {
  func.func @_mlp2_kernel(%arg0: i32, %arg1: memref<8x784xf32, #tpu.memory_space<vmem>>, %arg2: memref<784x128xf32, #tpu.memory_space<vmem>>, %arg3: memref<1x128xf32, #tpu.memory_space<vmem>>, %arg4: memref<128x128xf32, #tpu.memory_space<vmem>>, %arg5: memref<1x128xf32, #tpu.memory_space<vmem>>, %arg6: memref<8x128xf32, #tpu.memory_space<vmem>>) attributes {dimension_semantics = [#tpu.dimension_semantics<parallel>], iteration_bounds = array<i64: 1>, scalar_prefetch = 0 : i64, scratch_operands = 0 : i64, tpu.core_type = #tpu.core_type<tc>, window_params = [{transform_indices = @transform_0, window_bounds = array<i64: 8, 784>}, {pipeline_mode = #tpu.pipeline_mode<synchronous>, transform_indices = @transform_1, window_bounds = array<i64: 784, 128>}, {pipeline_mode = #tpu.pipeline_mode<synchronous>, transform_indices = @transform_2, window_bounds = array<i64: 1, 128>}, {pipeline_mode = #tpu.pipeline_mode<synchronous>, transform_indices = @transform_3, window_bounds = array<i64: 128, 128>}, {pipeline_mode = #tpu.pipeline_mode<synchronous>, transform_indices = @transform_4, window_bounds = array<i64: 1, 128>}, {transform_indices = @transform_5, window_bounds = array<i64: 8, 128>}]} {
    %c0 = arith.constant 0 : index
    %c0_0 = arith.constant 0 : index
    %0 = vector.load %arg1[%c0, %c0_0] : memref<8x784xf32, #tpu.memory_space<vmem>>, vector<8x784xf32>
    %c0_1 = arith.constant 0 : index
    %c0_2 = arith.constant 0 : index
    %1 = vector.load %arg2[%c0_1, %c0_2] : memref<784x128xf32, #tpu.memory_space<vmem>>, vector<784x128xf32>
    %cst = arith.constant dense<0.000000e+00> : vector<8x128xf32>
    %2 = tpu.matmul %0, %1, %cst {dimension_numbers = #tpu.dot_dimension_numbers<[1], [0], [0], [1], [0, 0, 1, 1], [], []>} : vector<8x784xf32>, vector<784x128xf32>, vector<8x128xf32> -> vector<8x128xf32>
    %c0_3 = arith.constant 0 : index
    %c0_4 = arith.constant 0 : index
    %3 = vector.load %arg3[%c0_3, %c0_4] : memref<1x128xf32, #tpu.memory_space<vmem>>, vector<1x128xf32>
    %4 = vector.broadcast %3 : vector<1x128xf32> to vector<8x128xf32>
    %5 = arith.addf %2, %4 : vector<8x128xf32>
    %cst_5 = arith.constant 0.000000e+00 : f32
    %6 = vector.broadcast %cst_5 : f32 to vector<8x128xf32>
    %7 = arith.maximumf %5, %6 : vector<8x128xf32>
    %c0_6 = arith.constant 0 : index
    %c0_7 = arith.constant 0 : index
    %8 = vector.load %arg4[%c0_6, %c0_7] : memref<128x128xf32, #tpu.memory_space<vmem>>, vector<128x128xf32>
    %cst_8 = arith.constant dense<0.000000e+00> : vector<8x128xf32>
    %9 = tpu.matmul %7, %8, %cst_8 {dimension_numbers = #tpu.dot_dimension_numbers<[1], [0], [0], [1], [0, 0, 1, 1], [], []>} : vector<8x128xf32>, vector<128x128xf32>, vector<8x128xf32> -> vector<8x128xf32>
    %c0_9 = arith.constant 0 : index
    %c0_10 = arith.constant 0 : index
    %10 = vector.load %arg5[%c0_9, %c0_10] : memref<1x128xf32, #tpu.memory_space<vmem>>, vector<1x128xf32>
    %11 = vector.broadcast %10 : vector<1x128xf32> to vector<8x128xf32>
    %12 = arith.addf %9, %11 : vector<8x128xf32>
    %c0_11 = arith.constant 0 : index
    %c0_12 = arith.constant 0 : index
    %13 = vector.load %arg6[%c0_11, %c0_12] : memref<8x128xf32, #tpu.memory_space<vmem>>, vector<8x128xf32>
    tpu.vector_store %arg6[%c0_11, %c0_12], %12 {strides = array<i32>} : memref<8x128xf32, #tpu.memory_space<vmem>>, vector<8x128xf32>,
    return
  }
  func.func @transform_0(%arg0: i32) -> (i32, i32) {
    %c0_i32 = arith.constant 0 : i32
    %c0_i32_0 = arith.constant 0 : i32
    return %arg0, %c0_i32 : i32, i32
  }
  func.func @transform_1(%arg0: i32) -> (i32, i32) {
    %c0_i32 = arith.constant 0 : i32
    %c0_i32_0 = arith.constant 0 : i32
    %c0_i32_1 = arith.constant 0 : i32
    return %c0_i32, %c0_i32_0 : i32, i32
  }
  func.func @transform_2(%arg0: i32) -> (i32, i32) {
    %c0_i32 = arith.constant 0 : i32
    %c0_i32_0 = arith.constant 0 : i32
    %c0_i32_1 = arith.constant 0 : i32
    return %c0_i32, %c0_i32_0 : i32, i32
  }
  func.func @transform_3(%arg0: i32) -> (i32, i32) {
    %c0_i32 = arith.constant 0 : i32
    %c0_i32_0 = arith.constant 0 : i32
    %c0_i32_1 = arith.constant 0 : i32
    return %c0_i32, %c0_i32_0 : i32, i32
  }
  func.func @transform_4(%arg0: i32) -> (i32, i32) {
    %c0_i32 = arith.constant 0 : i32
    %c0_i32_0 = arith.constant 0 : i32
    %c0_i32_1 = arith.constant 0 : i32
    return %c0_i32, %c0_i32_0 : i32, i32
  }
  func.func @transform_5(%arg0: i32) -> (i32, i32) {
    %c0_i32 = arith.constant 0 : i32
    %c0_i32_0 = arith.constant 0 : i32
    return %arg0, %c0_i32 : i32, i32
  }
}

</mosaic_0001>

<llo_original>
// kernel: mlp2_jit.1
$region0: #{mlp2_jit.1}
  #allocation0 [shape = 'u32[]', space=smem, size = 0x4, offset = 0x4, fixed_abs, tag = 'smem constant byte address 0x4 - core index']
  #allocation1 [shape = 'u32[144,128]{1,0:T(1,128)}', space=vmem, size = 0x12000, scoped, tag = 'internal scratch']
  %s0 = inlined_call_operand.vmem [shape: f32[8,784], index: 0, kind: input, shape index: {}]
  %s1 = inlined_call_operand.hbm [shape: f32[784,128], index: 1, kind: input, shape index: {}]
  %s2 = inlined_call_operand.vmem [shape: f32[1,128], index: 2, kind: input, shape index: {}]
  %s3 = inlined_call_operand.vmem [shape: f32[128,128], index: 3, kind: input, shape index: {}]
  %s4 = inlined_call_operand.vmem [shape: f32[1,128], index: 4, kind: input, shape index: {}]
  %s5 = inlined_call_operand.vmem [shape: f32[8,128], index: 5, kind: output, shape index: {}]
  %s6 = sld [smem:[#allocation0]]
  $region34: #{mlp2_jit.1} parent=0
    _
  %s8 = ssub.s32 1, %s6
  %s9 = scalar_select 0, %s8, %s6
  $region1: #{mlp2_jit.1} parent=0
    #allocation2 [shape = 'u8[401408]{0}', space=vmem, size = 0x62000, scoped, tag = 'input window, operand 1, single buffered']
    #allocation3 [shape = 's32[1]{0}', space=sflag, size = 0x4, scoped, tag = 'scoped memory for mlp2_jit.1']
    %10 = vsyncpa [#allocation3], 0
    // Predicated region
    $region2: #{mlp2_jit.1} parent=1 // pred_check
      _
    $region3: #{mlp2_jit.1} parent=1 // pred_check_branch
      %12 = sbr.rel (0) target = $region5
    $region4: #{mlp2_jit.1} parent=1 // pred_region
      _
    $region5: #{mlp2_jit.1} parent=1 // pred_fallthru
      _
    // Predicated region
    $region6: #{mlp2_jit.1} parent=1 // pred_check
      _
    $region7: #{mlp2_jit.1} parent=1 // pred_check_branch
      %14 = sbr.rel (0) target = $region9
    $region8: #{mlp2_jit.1} parent=1 // pred_region
      %s16 = ssub.s32 12544, 12544
      %17 = vsyncadd [#allocation3], %s16
      %s18 = sshll.u32 [#allocation2], 4
      %s19 = int_to_ptr.vmem [resolvable:$true] %s18
      %24 = dma.hbm_to_vmem [thread:$0]  %s1, 12544, %s19, [#allocation3], 128, 128, 8
    $region9: #{mlp2_jit.1} parent=1 // pred_fallthru
      _
    // Predicated region
    $region10: #{mlp2_jit.1} parent=1 // pred_check
      _
    $region11: #{mlp2_jit.1} parent=1 // pred_check_branch
      %26 = sbr.rel (0) target = $region13
    $region12: #{mlp2_jit.1} parent=1 // pred_region
      _
    $region13: #{mlp2_jit.1} parent=1 // pred_fallthru
      _
    // Predicated region
    $region14: #{mlp2_jit.1} parent=1 // pred_check
      _
    $region15: #{mlp2_jit.1} parent=1 // pred_check_branch
      %28 = sbr.rel (0) target = $region17
    $region16: #{mlp2_jit.1} parent=1 // pred_region
      _
    $region17: #{mlp2_jit.1} parent=1 // pred_fallthru
      _
    // Predicated region
    $region18: #{mlp2_jit.1} parent=1 // pred_check
      _
    $region19: #{mlp2_jit.1} parent=1 // pred_check_branch
      %30 = sbr.rel (0) target = $region21
    $region20: #{mlp2_jit.1} parent=1 // pred_region
      _
    $region21: #{mlp2_jit.1} parent=1 // pred_fallthru
      _
    // Predicated region
    $region22: #{mlp2_jit.1} parent=1 // pred_check
      _
    $region23: #{mlp2_jit.1} parent=1 // pred_check_branch
      %32 = sbr.rel (0) target = $region25
    $region24: #{mlp2_jit.1} parent=1 // pred_region
      %33 = dma.done [#allocation3], 12544
    $region25: #{mlp2_jit.1} parent=1 // pred_fallthru
      _
    %v34 = vld [vmem:[%s0] sm:$0xff]
    %v35 = vld [vmem:[%s0 + $0x8] sm:$0xff]
    %v36 = vld [vmem:[%s0 + $0x10] sm:$0xff]
    %v37 = vld [vmem:[%s0 + $0x18] sm:$0xff]
    %v38 = vld [vmem:[%s0 + $0x20] sm:$0xff]
    %v39 = vld [vmem:[%s0 + $0x28] sm:$0xff]
    %v40 = vld [vmem:[%s0 + $0x30] sm:$0xff]
    %v41 = vld [vmem:[#allocation2] sm:$0xff]
    %v42 = vld [vmem:[#allocation2 + $0x8] sm:$0xff]
    %v43 = vld [vmem:[#allocation2 + $0x10] sm:$0xff]
    %v44 = vld [vmem:[#allocation2 + $0x18] sm:$0xff]
    %v45 = vld [vmem:[#allocation2 + $0x20] sm:$0xff]
    %v46 = vld [vmem:[#allocation2 + $0x28] sm:$0xff]
    %v47 = vld [vmem:[#allocation2 + $0x30] sm:$0xff]
    %v48 = vld [vmem:[#allocation2 + $0x38] sm:$0xff]
    %v49 = vld [vmem:[#allocation2 + $0x40] sm:$0xff]
    %v50 = vld [vmem:[#allocation2 + $0x48] sm:$0xff]
    %v51 = vld [vmem:[#allocation2 + $0x50] sm:$0xff]
    %v52 = vld [vmem:[#allocation2 + $0x58] sm:$0xff]
    %v53 = vld [vmem:[#allocation2 + $0x60] sm:$0xff]
    %v54 = vld [vmem:[#allocation2 + $0x68] sm:$0xff]
    %v55 = vld [vmem:[#allocation2 + $0x70] sm:$0xff]
    %v56 = vld [vmem:[#allocation2 + $0x78] sm:$0xff]
    %v57 = vld [vmem:[#allocation2 + $0x80] sm:$0xff]
    %v58 = vld [vmem:[#allocation2 + $0x88] sm:$0xff]
    %v59 = vld [vmem:[#allocation2 + $0x90] sm:$0xff]
    %v60 = vld [vmem:[#allocation2 + $0x98] sm:$0xff]
    %v61 = vld [vmem:[#allocation2 + $0xa0] sm:$0xff]
    %v62 = vld [vmem:[#allocation2 + $0xa8] sm:$0xff]
    %v63 = vld [vmem:[#allocation2 + $0xb0] sm:$0xff]
    %v64 = vld [vmem:[#allocation2 + $0xb8] sm:$0xff]
    %v65 = vld [vmem:[#allocation2 + $0xc0] sm:$0xff]
    %v66 = vld [vmem:[#allocation2 + $0xc8] sm:$0xff]
    %v67 = vld [vmem:[#allocation2 + $0xd0] sm:$0xff]
    %v68 = vld [vmem:[#allocation2 + $0xd8] sm:$0xff]
    %v69 = vld [vmem:[#allocation2 + $0xe0] sm:$0xff]
    %v70 = vld [vmem:[#allocation2 + $0xe8] sm:$0xff]
    %v71 = vld [vmem:[#allocation2 + $0xf0] sm:$0xff]
    %v72 = vld [vmem:[#allocation2 + $0xf8] sm:$0xff]
    %v73 = vld [vmem:[#allocation2 + $0x100] sm:$0xff]
    %v74 = vld [vmem:[#allocation2 + $0x108] sm:$0xff]
    %v75 = vld [vmem:[#allocation2 + $0x110] sm:$0xff]
    %v76 = vld [vmem:[#allocation2 + $0x118] sm:$0xff]
    %v77 = vld [vmem:[#allocation2 + $0x120] sm:$0xff]
    %v78 = vld [vmem:[#allocation2 + $0x128] sm:$0xff]
    %v79 = vld [vmem:[#allocation2 + $0x130] sm:$0xff]
    %v80 = vld [vmem:[#allocation2 + $0x138] sm:$0xff]
    %v81 = vld [vmem:[#allocation2 + $0x140] sm:$0xff]
    %v82 = vld [vmem:[#allocation2 + $0x148] sm:$0xff]
    %v83 = vld [vmem:[#allocation2 + $0x150] sm:$0xff]
    %v84 = vld [vmem:[#allocation2 + $0x158] sm:$0xff]
    %v85 = vld [vmem:[#allocation2 + $0x160] sm:$0xff]
    %v86 = vld [vmem:[#allocation2 + $0x168] sm:$0xff]
    %v87 = vld [vmem:[#allocation2 + $0x170] sm:$0xff]
    %v88 = vld [vmem:[#allocation2 + $0x178] sm:$0xff]
    %v89 = vld [vmem:[#allocation2 + $0x180] sm:$0xff]
    %v90 = vld [vmem:[#allocation2 + $0x188] sm:$0xff]
    %v91 = vld [vmem:[#allocation2 + $0x190] sm:$0xff]
    %v92 = vld [vmem:[#allocation2 + $0x198] sm:$0xff]
    %v93 = vld [vmem:[#allocation2 + $0x1a0] sm:$0xff]
    %v94 = vld [vmem:[#allocation2 + $0x1a8] sm:$0xff]
    %v95 = vld [vmem:[#allocation2 + $0x1b0] sm:$0xff]
    %v96 = vld [vmem:[#allocation2 + $0x1b8] sm:$0xff]
    %v97 = vld [vmem:[#allocation2 + $0x1c0] sm:$0xff]
    %v98 = vld [vmem:[#allocation2 + $0x1c8] sm:$0xff]
    %v99 = vld [vmem:[#allocation2 + $0x1d0] sm:$0xff]
    %v100 = vld [vmem:[#allocation2 + $0x1d8] sm:$0xff]
    %v101 = vld [vmem:[#allocation2 + $0x1e0] sm:$0xff]
    %v102 = vld [vmem:[#allocation2 + $0x1e8] sm:$0xff]
    %v103 = vld [vmem:[#allocation2 + $0x1f0] sm:$0xff]
    %v104 = vld [vmem:[#allocation2 + $0x1f8] sm:$0xff]
    %v105 = vld [vmem:[#allocation2 + $0x200] sm:$0xff]
    %v106 = vld [vmem:[#allocation2 + $0x208] sm:$0xff]
    %v107 = vld [vmem:[#allocation2 + $0x210] sm:$0xff]
    %v108 = vld [vmem:[#allocation2 + $0x218] sm:$0xff]
    %v109 = vld [vmem:[#allocation2 + $0x220] sm:$0xff]
    %v110 = vld [vmem:[#allocation2 + $0x228] sm:$0xff]
    %v111 = vld [vmem:[#allocation2 + $0x230] sm:$0xff]
    %v112 = vld [vmem:[#allocation2 + $0x238] sm:$0xff]
    %v113 = vld [vmem:[#allocation2 + $0x240] sm:$0xff]
    %v114 = vld [vmem:[#allocation2 + $0x248] sm:$0xff]
    %v115 = vld [vmem:[#allocation2 + $0x250] sm:$0xff]
    %v116 = vld [vmem:[#allocation2 + $0x258] sm:$0xff]
    %v117 = vld [vmem:[#allocation2 + $0x260] sm:$0xff]
    %v118 = vld [vmem:[#allocation2 + $0x268] sm:$0xff]
    %v119 = vld [vmem:[#allocation2 + $0x270] sm:$0xff]
    %v120 = vld [vmem:[#allocation2 + $0x278] sm:$0xff]
    %v121 = vld [vmem:[#allocation2 + $0x280] sm:$0xff]
    %v122 = vld [vmem:[#allocation2 + $0x288] sm:$0xff]
    %v123 = vld [vmem:[#allocation2 + $0x290] sm:$0xff]
    %v124 = vld [vmem:[#allocation2 + $0x298] sm:$0xff]
    %v125 = vld [vmem:[#allocation2 + $0x2a0] sm:$0xff]
    %v126 = vld [vmem:[#allocation2 + $0x2a8] sm:$0xff]
    %v127 = vld [vmem:[#allocation2 + $0x2b0] sm:$0xff]
    %v128 = vld [vmem:[#allocation2 + $0x2b8] sm:$0xff]
    %v129 = vld [vmem:[#allocation2 + $0x2c0] sm:$0xff]
    %v130 = vld [vmem:[#allocation2 + $0x2c8] sm:$0xff]
    %v131 = vld [vmem:[#allocation2 + $0x2d0] sm:$0xff]
    %v132 = vld [vmem:[#allocation2 + $0x2d8] sm:$0xff]
    %v133 = vld [vmem:[#allocation2 + $0x2e0] sm:$0xff]
    %v134 = vld [vmem:[#allocation2 + $0x2e8] sm:$0xff]
    %v135 = vld [vmem:[#allocation2 + $0x2f0] sm:$0xff]
    %v136 = vld [vmem:[#allocation2 + $0x2f8] sm:$0xff]
    %v137 = vld [vmem:[#allocation2 + $0x300] sm:$0xff]
    %v138 = vld [vmem:[#allocation2 + $0x308] sm:$0xff]
    %v139 = vld [vmem:[%s2] sm:$0x1]
    %v141 = vlaneseq
    %v142 = vshrl.u32 %v141, 7
    %v143 = vsub.s32 0, %v142
    %v144 = vrot.slane %v139, %v143
    %vm146 = vcmask 130048
    %v148 = vsel %vm146, %v40, 0
    %150 = vmatprep.subr.mxu0 0.0
    %151 = vmatpush1.msra.mxu0 %v41
    %152 = vmatprep.subr.mxu0 0.0
    %153 = vmatpush1.msra.mxu0 %v42
    %154 = vmatprep.subr.mxu0 0.0
    %155 = vmatpush1.msra.mxu0 %v43
    %156 = vmatprep.subr.mxu0 0.0
    %157 = vmatpush1.msra.mxu0 %v44
    %158 = vmatprep.subr.mxu0 0.0
    %159 = vmatpush1.msra.mxu0 %v45
    %160 = vmatprep.subr.mxu0 0.0
    %161 = vmatpush1.msra.mxu0 %v46
    %162 = vmatprep.subr.mxu0 0.0
    %163 = vmatpush1.msra.mxu0 %v47
    %164 = vmatprep.subr.mxu0 0.0
    %165 = vmatpush1.msra.mxu0 %v48
    %166 = vmatprep.subr.mxu0 0.0
    %167 = vmatpush1.msra.mxu0 %v49
    %168 = vmatprep.subr.mxu0 0.0
    %169 = vmatpush1.msra.mxu0 %v50
    %170 = vmatprep.subr.mxu0 0.0
    %171 = vmatpush1.msra.mxu0 %v51
    %172 = vmatprep.subr.mxu0 0.0
    %173 = vmatpush1.msra.mxu0 %v52
    %174 = vmatprep.subr.mxu0 0.0
    %175 = vmatpush1.msra.mxu0 %v53
    %176 = vmatprep.subr.mxu0 0.0
    %177 = vmatpush1.msra.mxu0 %v54
    %178 = vmatprep.subr.mxu0 0.0
    %179 = vmatpush1.msra.mxu0 %v55
    %180 = vmatprep.subr.mxu0 0.0
    %181 = vmatpush1.msra.mxu0 %v56
    %182 = vmatprep.subr.mxu0 0.0
    %183 = vmatpush1.msra.mxu0 %v57
    %184 = vmatprep.subr.mxu0 0.0
    %185 = vmatpush1.msra.mxu0 %v58
    %186 = vmatprep.subr.mxu0 0.0
    %187 = vmatpush1.msra.mxu0 %v59
    %188 = vmatprep.subr.mxu0 0.0
    %189 = vmatpush1.msra.mxu0 %v60
    %190 = vmatprep.subr.mxu0 0.0
    %191 = vmatpush1.msra.mxu0 %v61
    %192 = vmatprep.subr.mxu0 0.0
    %193 = vmatpush1.msra.mxu0 %v62
    %194 = vmatprep.subr.mxu0 0.0
    %195 = vmatpush1.msra.mxu0 %v63
    %196 = vmatprep.subr.mxu0 0.0
    %197 = vmatpush1.msra.mxu0 %v64
    %198 = vmatprep.subr.mxu0 0.0
    %199 = vmatpush1.msra.mxu0 %v65
    %200 = vmatprep.subr.mxu0 0.0
    %201 = vmatpush1.msra.mxu0 %v66
    %202 = vmatprep.subr.mxu0 0.0
    %203 = vmatpush1.msra.mxu0 %v67
    %204 = vmatprep.subr.mxu0 0.0
    %205 = vmatpush1.msra.mxu0 %v68
    %206 = vmatprep.subr.mxu0 0.0
    %207 = vmatpush1.msra.mxu0 %v69
    %208 = vmatprep.subr.mxu0 0.0
    %209 = vmatpush1.msra.mxu0 %v70
    %210 = vmatprep.subr.mxu0 0.0
    %211 = vmatpush1.msra.mxu0 %v71
    %212 = vmatprep.subr.mxu0 0.0
    %213 = vmatpush1.msra.mxu0 %v72
    %214 = vmatprep.mubr.f32.mxu0 %v35
    %215 = vmatmul.mubr.f32.gmra.mrb[0].mxu0 %v34
    %v216 = vpop.f32.mrb[0].mxu0
    %v217 = vadd.f32 %v144, %v216
    %v218 = vpop.f32.mrb[0].mxu0
    %219 = vdwg.mxu0
    %220 = vmatprep.subr.mxu0 0.0
    %221 = vmatpush1.msra.mxu0 %v73
    %222 = vmatprep.subr.mxu0 0.0
    %223 = vmatpush1.msra.mxu0 %v74
    %224 = vmatprep.subr.mxu0 0.0
    %225 = vmatpush1.msra.mxu0 %v75
    %226 = vmatprep.subr.mxu0 0.0
    %227 = vmatpush1.msra.mxu0 %v76
    %228 = vmatprep.subr.mxu0 0.0
    %229 = vmatpush1.msra.mxu0 %v77
    %230 = vmatprep.subr.mxu0 0.0
    %231 = vmatpush1.msra.mxu0 %v78
    %232 = vmatprep.subr.mxu0 0.0
    %233 = vmatpush1.msra.mxu0 %v79
    %234 = vmatprep.subr.mxu0 0.0
    %235 = vmatpush1.msra.mxu0 %v80
    %236 = vmatprep.subr.mxu0 0.0
    %237 = vmatpush1.msra.mxu0 %v81
    %238 = vmatprep.subr.mxu0 0.0
    %239 = vmatpush1.msra.mxu0 %v82
    %240 = vmatprep.subr.mxu0 0.0
    %241 = vmatpush1.msra.mxu0 %v83
    %242 = vmatprep.subr.mxu0 0.0
    %243 = vmatpush1.msra.mxu0 %v84
    %244 = vmatprep.subr.mxu0 0.0
    %245 = vmatpush1.msra.mxu0 %v85
    %246 = vmatprep.subr.mxu0 0.0
    %247 = vmatpush1.msra.mxu0 %v86
    %248 = vmatprep.subr.mxu0 0.0
    %249 = vmatpush1.msra.mxu0 %v87
    %250 = vmatprep.subr.mxu0 0.0
    %251 = vmatpush1.msra.mxu0 %v88
    %252 = vmatprep.subr.mxu0 0.0
    %253 = vmatpush1.msra.mxu0 %v89
    %254 = vmatprep.subr.mxu0 0.0
    %255 = vmatpush1.msra.mxu0 %v90
    %256 = vmatprep.subr.mxu0 0.0
    %257 = vmatpush1.msra.mxu0 %v91
    %258 = vmatprep.subr.mxu0 0.0
    %259 = vmatpush1.msra.mxu0 %v92
    %260 = vmatprep.subr.mxu0 0.0
    %261 = vmatpush1.msra.mxu0 %v93
    %262 = vmatprep.subr.mxu0 0.0
    %263 = vmatpush1.msra.mxu0 %v94
    %264 = vmatprep.subr.mxu0 0.0
    %265 = vmatpush1.msra.mxu0 %v95
    %266 = vmatprep.subr.mxu0 0.0
    %267 = vmatpush1.msra.mxu0 %v96
    %268 = vmatprep.subr.mxu0 0.0
    %269 = vmatpush1.msra.mxu0 %v97
    %270 = vmatprep.subr.mxu0 0.0
    %271 = vmatpush1.msra.mxu0 %v98
    %272 = vmatprep.subr.mxu0 0.0
    %273 = vmatpush1.msra.mxu0 %v99
    %274 = vmatprep.subr.mxu0 0.0
    %275 = vmatpush1.msra.mxu0 %v100
    %276 = vmatprep.subr.mxu0 0.0
    %277 = vmatpush1.msra.mxu0 %v101
    %278 = vmatprep.subr.mxu0 0.0
    %279 = vmatpush1.msra.mxu0 %v102
    %280 = vmatprep.subr.mxu0 0.0
    %281 = vmatpush1.msra.mxu0 %v103
    %282 = vmatprep.subr.mxu0 0.0
    %283 = vmatpush1.msra.mxu0 %v104
    %284 = vmatprep.mubr.f32.mxu0 %v37
    %285 = vmatmul.mubr.f32.gmra.mrb[0].mxu0 %v36
    %v286 = vpop.f32.mrb[0].mxu0
    %v287 = vadd.f32 %v217, %v286
    %v288 = vpop.f32.mrb[0].mxu0
    %289 = vdwg.mxu0
    %290 = vmatprep.subr.mxu0 0.0
    %291 = vmatpush1.msra.mxu0 %v105
    %292 = vmatprep.subr.mxu0 0.0
    %293 = vmatpush1.msra.mxu0 %v106
    %294 = vmatprep.subr.mxu0 0.0
    %295 = vmatpush1.msra.mxu0 %v107
    %296 = vmatprep.subr.mxu0 0.0
    %297 = vmatpush1.msra.mxu0 %v108
    %298 = vmatprep.subr.mxu0 0.0
    %299 = vmatpush1.msra.mxu0 %v109
    %300 = vmatprep.subr.mxu0 0.0
    %301 = vmatpush1.msra.mxu0 %v110
    %302 = vmatprep.subr.mxu0 0.0
    %303 = vmatpush1.msra.mxu0 %v111
    %304 = vmatprep.subr.mxu0 0.0
    %305 = vmatpush1.msra.mxu0 %v112
    %306 = vmatprep.subr.mxu0 0.0
    %307 = vmatpush1.msra.mxu0 %v113
    %308 = vmatprep.subr.mxu0 0.0
    %309 = vmatpush1.msra.mxu0 %v114
    %310 = vmatprep.subr.mxu0 0.0
    %311 = vmatpush1.msra.mxu0 %v115
    %312 = vmatprep.subr.mxu0 0.0
    %313 = vmatpush1.msra.mxu0 %v116
    %314 = vmatprep.subr.mxu0 0.0
    %315 = vmatpush1.msra.mxu0 %v117
    %316 = vmatprep.subr.mxu0 0.0
    %317 = vmatpush1.msra.mxu0 %v118
    %318 = vmatprep.subr.mxu0 0.0
    %319 = vmatpush1.msra.mxu0 %v119
    %320 = vmatprep.subr.mxu0 0.0
    %321 = vmatpush1.msra.mxu0 %v120
    %322 = vmatprep.subr.mxu0 0.0
    %323 = vmatpush1.msra.mxu0 %v121
    %324 = vmatprep.subr.mxu0 0.0
    %325 = vmatpush1.msra.mxu0 %v122
    %326 = vmatprep.subr.mxu0 0.0
    %327 = vmatpush1.msra.mxu0 %v123
    %328 = vmatprep.subr.mxu0 0.0
    %329 = vmatpush1.msra.mxu0 %v124
    %330 = vmatprep.subr.mxu0 0.0
    %331 = vmatpush1.msra.mxu0 %v125
    %332 = vmatprep.subr.mxu0 0.0
    %333 = vmatpush1.msra.mxu0 %v126
    %334 = vmatprep.subr.mxu0 0.0
    %335 = vmatpush1.msra.mxu0 %v127
    %336 = vmatprep.subr.mxu0 0.0
    %337 = vmatpush1.msra.mxu0 %v128
    %338 = vmatprep.subr.mxu0 0.0
    %339 = vmatpush1.msra.mxu0 %v129
    %340 = vmatprep.subr.mxu0 0.0
    %341 = vmatpush1.msra.mxu0 %v130
    %342 = vmatprep.subr.mxu0 0.0
    %343 = vmatpush1.msra.mxu0 %v131
    %344 = vmatprep.subr.mxu0 0.0
    %345 = vmatpush1.msra.mxu0 %v132
    %346 = vmatprep.subr.mxu0 0.0
    %347 = vmatpush1.msra.mxu0 %v133
    %348 = vmatprep.subr.mxu0 0.0
    %349 = vmatpush1.msra.mxu0 %v134
    %350 = vmatprep.subr.mxu0 0.0
    %351 = vmatpush1.msra.mxu0 %v135
    %352 = vmatprep.subr.mxu0 0.0
    %353 = vmatpush1.msra.mxu0 %v136
    %354 = vmatprep.mubr.f32.mxu0 %v39
    %355 = vmatmul.mubr.f32.gmra.mrb[0].mxu0 %v38
    %v356 = vpop.f32.mrb[0].mxu0
    %v357 = vadd.f32 %v287, %v356
    %v358 = vpop.f32.mrb[0].mxu0
    %359 = vdwg.mxu0
    %360 = vmatprep.subr.mxu0 0.0
    %361 = vmatpush1.msra.mxu0 %v137
    %362 = vmatprep.subr.mxu0 0.0
    %363 = vmatpush1.msra.mxu0 %v138
    %364 = vmatprep.subr.mxu0 0.0
    %365 = vmatpush1.msra.mxu0 0.0
    %366 = vmatprep.subr.mxu0 0.0
    %367 = vmatpush1.msra.mxu0 0.0
    %368 = vmatprep.subr.mxu0 0.0
    %369 = vmatpush1.msra.mxu0 0.0
    %370 = vmatprep.subr.mxu0 0.0
    %371 = vmatpush1.msra.mxu0 0.0
    %372 = vmatprep.subr.mxu0 0.0
    %373 = vmatpush1.msra.mxu0 0.0
    %374 = vmatprep.subr.mxu0 0.0
    %375 = vmatpush1.msra.mxu0 0.0
    %376 = vmatprep.subr.mxu0 0.0
    %377 = vmatpush1.msra.mxu0 0.0
    %378 = vmatprep.subr.mxu0 0.0
    %379 = vmatpush1.msra.mxu0 0.0
    %380 = vmatprep.subr.mxu0 0.0
    %381 = vmatpush1.msra.mxu0 0.0
    %382 = vmatprep.subr.mxu0 0.0
    %383 = vmatpush1.msra.mxu0 0.0
    %384 = vmatprep.subr.mxu0 0.0
    %385 = vmatpush1.msra.mxu0 0.0
    %386 = vmatprep.subr.mxu0 0.0
    %387 = vmatpush1.msra.mxu0 0.0
    %388 = vmatprep.subr.mxu0 0.0
    %389 = vmatpush1.msra.mxu0 0.0
    %390 = vmatprep.subr.mxu0 0.0
    %391 = vmatpush1.msra.mxu0 0.0
    %392 = vmatprep.subr.mxu0 0.0
    %393 = vmatpush1.msra.mxu0 0.0
    %394 = vmatprep.subr.mxu0 0.0
    %395 = vmatpush1.msra.mxu0 0.0
    %396 = vmatprep.subr.mxu0 0.0
    %397 = vmatpush1.msra.mxu0 0.0
    %398 = vmatprep.subr.mxu0 0.0
    %399 = vmatpush1.msra.mxu0 0.0
    %400 = vmatprep.subr.mxu0 0.0
    %401 = vmatpush1.msra.mxu0 0.0
    %402 = vmatprep.subr.mxu0 0.0
    %403 = vmatpush1.msra.mxu0 0.0
    %404 = vmatprep.subr.mxu0 0.0
    %405 = vmatpush1.msra.mxu0 0.0
    %406 = vmatprep.subr.mxu0 0.0
    %407 = vmatpush1.msra.mxu0 0.0
    %408 = vmatprep.subr.mxu0 0.0
    %409 = vmatpush1.msra.mxu0 0.0
    %410 = vmatprep.subr.mxu0 0.0
    %411 = vmatpush1.msra.mxu0 0.0
    %412 = vmatprep.subr.mxu0 0.0
    %413 = vmatpush1.msra.mxu0 0.0
    %414 = vmatprep.subr.mxu0 0.0
    %415 = vmatpush1.msra.mxu0 0.0
    %416 = vmatprep.subr.mxu0 0.0
    %417 = vmatpush1.msra.mxu0 0.0
    %418 = vmatprep.subr.mxu0 0.0
    %419 = vmatpush1.msra.mxu0 0.0
    %420 = vmatprep.subr.mxu0 0.0
    %421 = vmatpush1.msra.mxu0 0.0
    %422 = vmatprep.subr.mxu0 0.0
    %423 = vmatpush1.msra.mxu0 0.0
    %424 = vmatprep.mubr.f32.mxu0 0.0
    %425 = vmatmul.mubr.f32.gmra.mrb[0].mxu0 %v148
    %v426 = vpop.f32.mrb[0].mxu0
    %v427 = vadd.f32 %v357, %v426
    %v428 = vpop.f32.mrb[0].mxu0
    %429 = vdwg.mxu0
    %v430 = vmax.f32 %v427, 0.0
    %v431 = vld [vmem:[%s3] sm:$0xff]
    %v432 = vld [vmem:[%s3 + $0x8] sm:$0xff]
    %v433 = vld [vmem:[%s3 + $0x10] sm:$0xff]
    %v434 = vld [vmem:[%s3 + $0x18] sm:$0xff]
    %v435 = vld [vmem:[%s3 + $0x20] sm:$0xff]
    %v436 = vld [vmem:[%s3 + $0x28] sm:$0xff]
    %v437 = vld [vmem:[%s3 + $0x30] sm:$0xff]
    %v438 = vld [vmem:[%s3 + $0x38] sm:$0xff]
    %v439 = vld [vmem:[%s3 + $0x40] sm:$0xff]
    %v440 = vld [vmem:[%s3 + $0x48] sm:$0xff]
    %v441 = vld [vmem:[%s3 + $0x50] sm:$0xff]
    %v442 = vld [vmem:[%s3 + $0x58] sm:$0xff]
    %v443 = vld [vmem:[%s3 + $0x60] sm:$0xff]
    %v444 = vld [vmem:[%s3 + $0x68] sm:$0xff]
    %v445 = vld [vmem:[%s3 + $0x70] sm:$0xff]
    %v446 = vld [vmem:[%s3 + $0x78] sm:$0xff]
    %v447 = vld [vmem:[%s4] sm:$0x1]
    %v449 = vlaneseq
    %v450 = vshrl.u32 %v449, 7
    %v451 = vsub.s32 0, %v450
    %v452 = vrot.slane %v447, %v451
    %454 = vmatprep.subr.mxu0 0.0
    %455 = vmatpush1.msra.mxu0 %v431
    %456 = vmatprep.subr.mxu0 0.0
    %457 = vmatpush1.msra.mxu0 %v432
    %458 = vmatprep.subr.mxu0 0.0
    %459 = vmatpush1.msra.mxu0 %v433
    %460 = vmatprep.subr.mxu0 0.0
    %461 = vmatpush1.msra.mxu0 %v434
    %462 = vmatprep.subr.mxu0 0.0
    %463 = vmatpush1.msra.mxu0 %v435
    %464 = vmatprep.subr.mxu0 0.0
    %465 = vmatpush1.msra.mxu0 %v436
    %466 = vmatprep.subr.mxu0 0.0
    %467 = vmatpush1.msra.mxu0 %v437
    %468 = vmatprep.subr.mxu0 0.0
    %469 = vmatpush1.msra.mxu0 %v438
    %470 = vmatprep.subr.mxu0 0.0
    %471 = vmatpush1.msra.mxu0 %v439
    %472 = vmatprep.subr.mxu0 0.0
    %473 = vmatpush1.msra.mxu0 %v440
    %474 = vmatprep.subr.mxu0 0.0
    %475 = vmatpush1.msra.mxu0 %v441
    %476 = vmatprep.subr.mxu0 0.0
    %477 = vmatpush1.msra.mxu0 %v442
    %478 = vmatprep.subr.mxu0 0.0
    %479 = vmatpush1.msra.mxu0 %v443
    %480 = vmatprep.subr.mxu0 0.0
    %481 = vmatpush1.msra.mxu0 %v444
    %482 = vmatprep.subr.mxu0 0.0
    %483 = vmatpush1.msra.mxu0 %v445
    %484 = vmatprep.subr.mxu0 0.0
    %485 = vmatpush1.msra.mxu0 %v446
    %486 = vmatprep.subr.mxu0 0.0
    %487 = vmatpush1.msra.mxu0 0.0
    %488 = vmatprep.subr.mxu0 0.0
    %489 = vmatpush1.msra.mxu0 0.0
    %490 = vmatprep.subr.mxu0 0.0
    %491 = vmatpush1.msra.mxu0 0.0
    %492 = vmatprep.subr.mxu0 0.0
    %493 = vmatpush1.msra.mxu0 0.0
    %494 = vmatprep.subr.mxu0 0.0
    %495 = vmatpush1.msra.mxu0 0.0
    %496 = vmatprep.subr.mxu0 0.0
    %497 = vmatpush1.msra.mxu0 0.0
    %498 = vmatprep.subr.mxu0 0.0
    %499 = vmatpush1.msra.mxu0 0.0
    %500 = vmatprep.subr.mxu0 0.0
    %501 = vmatpush1.msra.mxu0 0.0
    %502 = vmatprep.subr.mxu0 0.0
    %503 = vmatpush1.msra.mxu0 0.0
    %504 = vmatprep.subr.mxu0 0.0
    %505 = vmatpush1.msra.mxu0 0.0
    %506 = vmatprep.subr.mxu0 0.0
    %507 = vmatpush1.msra.mxu0 0.0
    %508 = vmatprep.subr.mxu0 0.0
    %509 = vmatpush1.msra.mxu0 0.0
    %510 = vmatprep.subr.mxu0 0.0
    %511 = vmatpush1.msra.mxu0 0.0
    %512 = vmatprep.subr.mxu0 0.0
    %513 = vmatpush1.msra.mxu0 0.0
    %514 = vmatprep.subr.mxu0 0.0
    %515 = vmatpush1.msra.mxu0 0.0
    %516 = vmatprep.subr.mxu0 0.0
    %517 = vmatpush1.msra.mxu0 0.0
    %518 = vmatprep.mubr.f32.mxu0 0.0
    %519 = vmatmul.mubr.f32.gmra.mrb[0].mxu0 %v430
    %v520 = vpop.f32.mrb[0].mxu0
    %v521 = vadd.f32 %v452, %v520
    %v522 = vpop.f32.mrb[0].mxu0
    %523 = vdwg.mxu0
    %524 = vst [vmem:[%s5] sm:$0xff] %v521
    // Predicated region
    $region26: #{mlp2_jit.1} parent=1 // pred_check
      _
    $region27: #{mlp2_jit.1} parent=1 // pred_check_branch
      %526 = sbr.rel (0) target = $region29
    $region28: #{mlp2_jit.1} parent=1 // pred_region
      _
    $region29: #{mlp2_jit.1} parent=1 // pred_fallthru
      _
    // Predicated region
    $region30: #{mlp2_jit.1} parent=1 // pred_check
      _
    $region31: #{mlp2_jit.1} parent=1 // pred_check_branch
      %528 = sbr.rel (0) target = $region33
    $region32: #{mlp2_jit.1} parent=1 // pred_region
      _
    $region33: #{mlp2_jit.1} parent=1 // pred_fallthru
      _
    %529 = vsyncpa [#allocation3], 1

</llo_original>
